<compile_context>
chip_gen: v5e
topology: v5e:2x2
jax: 0.10.0
libtpu: 0.0.40
codegen_flags: <defaults>
</compile_context>

<pallas_src>
import jax
import jax.numpy as jnp
from jax.experimental import pallas as pl
from jax.experimental.pallas import tpu as pltpu


def _make_mlp_kernel(num_layers, dx, out_dim):
    """Build a fused feature-major MLP kernel: h_next = W @ h + b."""

    def kernel(*refs):
        x_ref, o_ref = refs[0], refs[-1]
        wb = refs[1:-1]                       # w0, b0, w1, b1, ...

        x = x_ref[...]                        # (dx, block_n)
        w0, b0 = wb[0][...], wb[1][...]
        if dx == 1:
            # Outer product (h1, 1) * (1, block_n) on the VPU.
            h = w0 * x + b0
        else:
            h = jnp.dot(w0, x, preferred_element_type=jnp.float32) + b0

        for li in range(1, num_layers):
            w, b = wb[2 * li][...], wb[2 * li + 1][...]
            h = jnp.tanh(h)                   # f32 EUP (v5e has no bf16 EUP)
            if li == num_layers - 1 and out_dim == 1:
                # (h2, 1) column * (h2, bn) -> sublane reduce on the XLU;
                # avoids a 1-output-row MXU push + FIFO drain per tile.
                h = jnp.sum(w * h, axis=0, keepdims=True) + b
            else:
                h = jnp.dot(w, h, preferred_element_type=jnp.float32) + b

        o_ref[...] = h.astype(o_ref.dtype)

    return kernel


def net_forward(x, z, params, *, block_n=1024):
    """Forward pass of Net(ks).

    x: (N, dx) f32.  z: (1, nz) (folded into bias) or (N, nz) f32.
    params: list of (W, b) in PyTorch layout: W (out, in), b (out,).
    Returns (N, out_dim) f32.
    """
    x = x.astype(jnp.float32)
    z = z.astype(jnp.float32)
    n, dx = x.shape
    num_layers = len(params)
    out_dim = params[-1][0].shape[0]

    w0, b0 = params[0]
    w0 = w0.astype(jnp.float32)
    b0 = b0.astype(jnp.float32)
    if z.shape[0] == 1:
        # Fold z into the first-layer bias exactly (VPU mul + sum, no matmul).
        w0x = w0[:, :dx]                                   # (h1, dx)
        b0_eff = (b0 + jnp.sum(w0[:, dx:] * z, axis=1))[:, None]
        x_feat = x.reshape(1, n) if dx == 1 else x.T       # (dx, N); dx==1 is a free reshape
        dx_eff = dx
    else:
        # Per-row z: cannot fold; stream hstack([x, z]) feature-major.
        w0x = w0
        b0_eff = b0[:, None]
        x_feat = jnp.concatenate([x, z], axis=1).T
        dx_eff = dx + z.shape[1]

    # Flat (W, b) list in feature-major kernel layout.
    flat = [w0x, b0_eff]
    for li in range(1, num_layers):
        w, b = params[li]
        w = w.astype(jnp.float32)
        b = b.astype(jnp.float32)
        if li == num_layers - 1 and out_dim == 1:
            w = w.T                                        # (h_in, 1) column for VPU final layer
        flat += [w, b[:, None]]

    # --- Batch tiling: block_n multiple of 128, no pad / no output slice. ---
    n_128 = ((n + 127) // 128) * 128
    block_n = max(128, (block_n // 128) * 128)             # force multiple of 128
    if n_128 >= 256:
        # Keep >= 2 grid steps so v7x can shard tiles across both TensorCores.
        block_n = min(block_n, max(128, (n_128 // 256) * 128))
    if n < 128:
        block_n = n                                        # single full-extent block
    else:
        block_n = min(block_n, n_128)
    grid = (pl.cdiv(n, block_n),)                          # ragged tail masked by Pallas

    def resident(a):
        # Full-array block, same block every grid step -> stays in VMEM.
        return pl.BlockSpec(a.shape, lambda i: (0, 0))

    in_specs = [pl.BlockSpec((dx_eff, block_n), lambda i: (0, i))]
    in_specs += [resident(a) for a in flat]

    out = pl.pallas_call(
        _make_mlp_kernel(num_layers, dx_eff, out_dim),
        out_shape=jax.ShapeDtypeStruct((out_dim, n), jnp.float32),
        grid=grid,
        in_specs=in_specs,
        out_specs=pl.BlockSpec((out_dim, block_n), lambda i: (0, i)),
        compiler_params=pltpu.CompilerParams(
            dimension_semantics=("parallel",)),
    )(x_feat, *flat)

    if out_dim == 1:
        return out.reshape(n, 1)                           # free reshape (no transpose pass)
    return out.T


def init_params(key, ks):
    """PyTorch-Linear-style init: W (out, in), b (out,), U[-1/sqrt(in), 1/sqrt(in)]."""
    params = []
    for fan_in, fan_out in zip(ks[:-1], ks[1:]):
        key, kw, kb = jax.random.split(key, 3)
        bound = 1.0 / jnp.sqrt(jnp.float32(fan_in))
        w = jax.random.uniform(kw, (fan_out, fan_in), jnp.float32, -bound, bound)
        b = jax.random.uniform(kb, (fan_out,), jnp.float32, -bound, bound)
        params.append((w, b))
    return params


def net_forward_ref(x, z, params):
    """Pure-JAX batch-major reference, full f32 precision (PyTorch parity)."""
    n = x.shape[0]
    if z.shape[0] == 1 and n != 1:
        z = jnp.broadcast_to(z, (n, z.shape[1]))
    h = jnp.concatenate([x, z], axis=1)
    hp = jax.lax.Precision.HIGHEST
    for i, (w, b) in enumerate(params):
        if i > 0:
            h = jnp.tanh(h)
        h = jnp.dot(h, w.T, precision=hp) + b
    return h


if __name__ == "__main__":
    key = jax.random.PRNGKey(0)

    nz = 1
    dx = 1
    hidden = 32
    ks = [dx + nz, hidden, hidden, 1]        # first layer eats hstack([x, z])

    k_params, k_z = jax.random.split(key, 2)
    params = init_params(k_params, ks)

    N = 256
    x = jnp.linspace(0.0, 2.0 * jnp.pi, N, dtype=jnp.float32).reshape(N, 1)
    z = 0.1 * jax.random.normal(k_z, (1, nz), dtype=jnp.float32)

    # Default block_n is capped to keep 2 grid steps here (one tile per v7x TC).
    out = net_forward(x, z, params)
    out = jax.block_until_ready(out)

    ref = net_forward_ref(x, z, params)
    assert out.shape == (N, 1), out.shape
    assert jnp.allclose(out, ref, atol=1e-5, rtol=1e-5), jnp.max(jnp.abs(out - ref))

    print("KERNEL_OK")
</pallas_src>

<mosaic_0001>
module attributes {stable_mosaic.version = 11 : i64} {
  func.func @kernel(%arg0: i32, %arg1: memref<1x128xf32, #tpu.memory_space<vmem>>, %arg2: memref<32x1xf32, #tpu.memory_space<vmem>>, %arg3: memref<32x1xf32, #tpu.memory_space<vmem>>, %arg4: memref<32x32xf32, #tpu.memory_space<vmem>>, %arg5: memref<32x1xf32, #tpu.memory_space<vmem>>, %arg6: memref<32x1xf32, #tpu.memory_space<vmem>>, %arg7: memref<1x1xf32, #tpu.memory_space<vmem>>, %arg8: memref<1x128xf32, #tpu.memory_space<vmem>>) attributes {dimension_semantics = [#tpu.dimension_semantics<parallel>], iteration_bounds = array<i64: 2>, scalar_prefetch = 0 : i64, scratch_operands = 0 : i64, tpu.core_type = #tpu.core_type<tc>, window_params = [{transform_indices = @transform_0, window_bounds = array<i64: 1, 128>}, {pipeline_mode = #tpu.pipeline_mode<synchronous>, transform_indices = @transform_1, window_bounds = array<i64: 32, 1>}, {pipeline_mode = #tpu.pipeline_mode<synchronous>, transform_indices = @transform_2, window_bounds = array<i64: 32, 1>}, {pipeline_mode = #tpu.pipeline_mode<synchronous>, transform_indices = @transform_3, window_bounds = array<i64: 32, 32>}, {pipeline_mode = #tpu.pipeline_mode<synchronous>, transform_indices = @transform_4, window_bounds = array<i64: 32, 1>}, {pipeline_mode = #tpu.pipeline_mode<synchronous>, transform_indices = @transform_5, window_bounds = array<i64: 32, 1>}, {pipeline_mode = #tpu.pipeline_mode<synchronous>, transform_indices = @transform_6, window_bounds = array<i64: 1, 1>}, {transform_indices = @transform_7, window_bounds = array<i64: 1, 128>}]} {
    %c0 = arith.constant 0 : index
    %c0_0 = arith.constant 0 : index
    %0 = vector.load %arg1[%c0, %c0_0] : memref<1x128xf32, #tpu.memory_space<vmem>>, vector<1x128xf32>
    %c0_1 = arith.constant 0 : index
    %c0_2 = arith.constant 0 : index
    %1 = vector.load %arg2[%c0_1, %c0_2] : memref<32x1xf32, #tpu.memory_space<vmem>>, vector<32x1xf32>
    %c0_3 = arith.constant 0 : index
    %c0_4 = arith.constant 0 : index
    %2 = vector.load %arg3[%c0_3, %c0_4] : memref<32x1xf32, #tpu.memory_space<vmem>>, vector<32x1xf32>
    %3 = vector.broadcast %1 : vector<32x1xf32> to vector<32x128xf32>
    %4 = vector.broadcast %0 : vector<1x128xf32> to vector<32x128xf32>
    %5 = arith.mulf %3, %4 : vector<32x128xf32>
    %6 = vector.broadcast %2 : vector<32x1xf32> to vector<32x128xf32>
    %7 = arith.addf %5, %6 : vector<32x128xf32>
    %c0_5 = arith.constant 0 : index
    %c0_6 = arith.constant 0 : index
    %8 = vector.load %arg4[%c0_5, %c0_6] : memref<32x32xf32, #tpu.memory_space<vmem>>, vector<32x32xf32>
    %c0_7 = arith.constant 0 : index
    %c0_8 = arith.constant 0 : index
    %9 = vector.load %arg5[%c0_7, %c0_8] : memref<32x1xf32, #tpu.memory_space<vmem>>, vector<32x1xf32>
    %10 = math.tanh %7 : vector<32x128xf32>
    %cst = arith.constant dense<0.000000e+00> : vector<32x128xf32>
    %11 = tpu.matmul %8, %10, %cst {dimension_numbers = #tpu.dot_dimension_numbers<[1], [0], [0], [1], [0, 0, 1, 1], [], []>} : vector<32x32xf32>, vector<32x128xf32>, vector<32x128xf32> -> vector<32x128xf32>
    %12 = vector.broadcast %9 : vector<32x1xf32> to vector<32x128xf32>
    %13 = arith.addf %11, %12 : vector<32x128xf32>
    %c0_9 = arith.constant 0 : index
    %c0_10 = arith.constant 0 : index
    %14 = vector.load %arg6[%c0_9, %c0_10] : memref<32x1xf32, #tpu.memory_space<vmem>>, vector<32x1xf32>
    %c0_11 = arith.constant 0 : index
    %c0_12 = arith.constant 0 : index
    %15 = vector.load %arg7[%c0_11, %c0_12] : memref<1x1xf32, #tpu.memory_space<vmem>>, vector<1x1xf32>
    %16 = math.tanh %13 : vector<32x128xf32>
    %17 = vector.broadcast %14 : vector<32x1xf32> to vector<32x128xf32>
    %18 = arith.mulf %17, %16 : vector<32x128xf32>
    %cst_13 = arith.constant dense<0.000000e+00> : vector<128xf32>
    %19 = vector.multi_reduction <add>, %18, %cst_13 [0] : vector<32x128xf32> to vector<128xf32>
    %20 = vector.shape_cast %19 : vector<128xf32> to vector<1x128xf32>
    %21 = vector.broadcast %15 : vector<1x1xf32> to vector<1x128xf32>
    %22 = arith.addf %20, %21 : vector<1x128xf32>
    %c0_14 = arith.constant 0 : index
    %c0_15 = arith.constant 0 : index
    %23 = vector.load %arg8[%c0_14, %c0_15] : memref<1x128xf32, #tpu.memory_space<vmem>>, vector<1x128xf32>
    tpu.vector_store %arg8[%c0_14, %c0_15], %22 {strides = array<i32>} : memref<1x128xf32, #tpu.memory_space<vmem>>, vector<1x128xf32>,
    return
  }
  func.func @transform_0(%arg0: i32) -> (i32, i32) {
    %c0_i32 = arith.constant 0 : i32
    %c0_i32_0 = arith.constant 0 : i32
    return %c0_i32, %arg0 : i32, i32
  }
  func.func @transform_1(%arg0: i32) -> (i32, i32) {
    %c0_i32 = arith.constant 0 : i32
    %c0_i32_0 = arith.constant 0 : i32
    %c0_i32_1 = arith.constant 0 : i32
    return %c0_i32, %c0_i32_0 : i32, i32
  }
  func.func @transform_2(%arg0: i32) -> (i32, i32) {
    %c0_i32 = arith.constant 0 : i32
    %c0_i32_0 = arith.constant 0 : i32
    %c0_i32_1 = arith.constant 0 : i32
    return %c0_i32, %c0_i32_0 : i32, i32
  }
  func.func @transform_3(%arg0: i32) -> (i32, i32) {
    %c0_i32 = arith.constant 0 : i32
    %c0_i32_0 = arith.constant 0 : i32
    %c0_i32_1 = arith.constant 0 : i32
    return %c0_i32, %c0_i32_0 : i32, i32
  }
  func.func @transform_4(%arg0: i32) -> (i32, i32) {
    %c0_i32 = arith.constant 0 : i32
    %c0_i32_0 = arith.constant 0 : i32
    %c0_i32_1 = arith.constant 0 : i32
    return %c0_i32, %c0_i32_0 : i32, i32
  }
  func.func @transform_5(%arg0: i32) -> (i32, i32) {
    %c0_i32 = arith.constant 0 : i32
    %c0_i32_0 = arith.constant 0 : i32
    %c0_i32_1 = arith.constant 0 : i32
    return %c0_i32, %c0_i32_0 : i32, i32
  }
  func.func @transform_6(%arg0: i32) -> (i32, i32) {
    %c0_i32 = arith.constant 0 : i32
    %c0_i32_0 = arith.constant 0 : i32
    %c0_i32_1 = arith.constant 0 : i32
    return %c0_i32, %c0_i32_0 : i32, i32
  }
  func.func @transform_7(%arg0: i32) -> (i32, i32) {
    %c0_i32 = arith.constant 0 : i32
    %c0_i32_0 = arith.constant 0 : i32
    return %c0_i32, %arg0 : i32, i32
  }
}

</mosaic_0001>

<llo_original>
// kernel: tpu_custom_call.1
$region0: #{tpu_custom_call.1}
  #allocation0 [shape = 'u32[]', space=smem, size = 0x4, offset = 0x4, fixed_abs, tag = 'smem constant byte address 0x4 - core index']
  #allocation1 [shape = 'u32[72,128]{1,0:T(1,128)}', space=vmem, size = 0x9000, scoped, tag = 'internal scratch']
  #allocation2 [shape = 'f32[1,1]{1,0:T(1,128)S(1)}', space=vmem, size = 0x200, scoped, tag = 'scoped memory for tpu_custom_call.1']
  %s0 = inlined_call_operand.vmem [shape: f32[1,256], index: 0, kind: input, shape index: {}]
  %s1 = inlined_call_operand.vmem [shape: f32[32,1], index: 1, kind: input, shape index: {}]
  %s2 = inlined_call_operand.vmem [shape: f32[32,1], index: 2, kind: input, shape index: {}]
  %s3 = inlined_call_operand.vmem [shape: f32[32,32], index: 3, kind: input, shape index: {}]
  %s4 = inlined_call_operand.vmem [shape: f32[32,1], index: 4, kind: input, shape index: {}]
  %s5 = inlined_call_operand.vmem [shape: f32[32,1], index: 5, kind: input, shape index: {}]
  %s6 = inlined_call_operand.<no memory space> [shape: f32[1,1], index: 6, kind: input, shape index: {}]
  %s7 = inlined_call_operand.hbm [shape: f32[1,256], index: 7, kind: output, shape index: {}]
  %s8 = sld [smem:[#allocation0]]
  $region61: #{tpu_custom_call.1} parent=0
    _
  %s10 = ssub.s32 1, %s8
  %s11 = scalar_select 0, %s10, %s8
  %v12 = vstv %s6
  %13 = vst [vmem:[#allocation2] sm:$0x1] %v12
  $region1: #{tpu_custom_call.1} parent=0
    #allocation3 [shape = 'u8[1024]{0}', space=vmem, size = 0x400, scoped, tag = 'output window, operand 0']
    #allocation4 [shape = 's32[2]{0}', space=sflag, size = 0x8, scoped, tag = 'scoped memory for tpu_custom_call.1']
    %14 = vsyncpa [#allocation4], 0
    %s15 = scalar_lea.sflag [#allocation4], 1
    %16 = vsyncpa %s15, 0
    loop: start=0, step=1, limit=4
    $region2: #{tpu_custom_call.1} parent=1 // loop_pre_header
      _
    $region3: #{tpu_custom_call.1} parent=1 // loop_header
      %s18 = sphi 0, %s22
      %p19 = scmp.ge.s32.totalorder %s18, 4
      %s28 = sphi 0, %s30
      %s31 = sphi 0, %s28
      %s32 = sphi 0, %s31
      %s48 = sphi 0, %s32
      %s52 = sphi 0, %s52
      %s54 = sphi 0, %s52
      %s55 = sphi 0, %s54
      %s69 = sphi 0, %s55
      %s73 = sphi 0, %s73
      %s75 = sphi 0, %s73
      %s76 = sphi 0, %s75
      %s90 = sphi 0, %s76
      %s94 = sphi 0, %s94
      %s96 = sphi 0, %s94
      %s97 = sphi 0, %s96
      %s111 = sphi 0, %s97
      %s115 = sphi 0, %s115
      %s117 = sphi 0, %s115
      %s118 = sphi 0, %s117
      %s132 = sphi 0, %s118
      %s136 = sphi 0, %s136
      %s138 = sphi 0, %s136
      %s139 = sphi 0, %s138
      %s153 = sphi 0, %s139
      %s157 = sphi 0, %s157
      %s159 = sphi 0, %s157
      %s160 = sphi 0, %s159
      %s174 = sphi 0, %s160
      %s180 = sphi 0, %s182
      %s183 = sphi 0, %s180
      %s184 = sphi 0, %s183
      %s200 = sphi 0, %s184
    $region4: #{tpu_custom_call.1} parent=1 // loop_header_branch
      %21 = sbr.rel (%p19) target = $region8
    $region5: #{tpu_custom_call.1} parent=1 // loop_body
      %s23 = ssub.s32 %s18, 1
      %s24 = ssub.s32 %s18, 2
      %s25 = sadd.s32 %s18, 1
      %s26 = ssub.s32 %s18, %s25
      %p27 = scmp.eq.s32.totalorder %s26, 0
      %s29 = sadd.s32 %s28, 1
      %s30 = scalar_select %p27, %s28, %s29
      %p33 = pneg %p27
      %p34 = scmp.eq.s32.totalorder %s18, 1
      %p35 = por %p33, %p34
      %p36 = scmp.ne.s32.totalorder %s28, %s31
      %p37 = scmp.eq.s32.totalorder %s18, 0
      %p38 = por %p36, %p37
      %p39 = scmp.ne.s32.totalorder %s28, %s31
      %p40 = scmp.eq.s32.totalorder %s23, 1
      %p41 = por %p39, %p40
      %p42 = scmp.ne.s32.totalorder %s31, %s32
      %p43 = scmp.eq.s32.totalorder %s23, 0
      %p44 = por %p42, %p43
      %p45 = scmp.ne.s32.totalorder %s31, %s32
      %p46 = scmp.eq.s32.totalorder %s24, 1
      %p47 = por %p45, %p46
      %p49 = scmp.ne.s32.totalorder %s32, %s48
      %p50 = scmp.eq.s32.totalorder %s24, 0
      %p51 = por %p49, %p50
      %s53 = sadd.s32 %s52, 1
      %p56 = scmp.eq.s32.totalorder %s18, 1
      %p57 = scmp.ne.s32.totalorder %s52, %s54
      %p58 = scmp.eq.s32.totalorder %s18, 0
      %p59 = por %p57, %p58
      %p60 = scmp.ne.s32.totalorder %s52, %s54
      %p61 = scmp.eq.s32.totalorder %s23, 1
      %p62 = por %p60, %p61
      %p63 = scmp.ne.s32.totalorder %s54, %s55
      %p64 = scmp.eq.s32.totalorder %s23, 0
      %p65 = por %p63, %p64
      %p66 = scmp.ne.s32.totalorder %s54, %s55
      %p67 = scmp.eq.s32.totalorder %s24, 1
      %p68 = por %p66, %p67
      %p70 = scmp.ne.s32.totalorder %s55, %s69
      %p71 = scmp.eq.s32.totalorder %s24, 0
      %p72 = por %p70, %p71
      %s74 = sadd.s32 %s73, 1
      %p77 = scmp.eq.s32.totalorder %s18, 1
      %p78 = scmp.ne.s32.totalorder %s73, %s75
      %p79 = scmp.eq.s32.totalorder %s18, 0
      %p80 = por %p78, %p79
      %p81 = scmp.ne.s32.totalorder %s73, %s75
      %p82 = scmp.eq.s32.totalorder %s23, 1
      %p83 = por %p81, %p82
      %p84 = scmp.ne.s32.totalorder %s75, %s76
      %p85 = scmp.eq.s32.totalorder %s23, 0
      %p86 = por %p84, %p85
      %p87 = scmp.ne.s32.totalorder %s75, %s76
      %p88 = scmp.eq.s32.totalorder %s24, 1
      %p89 = por %p87, %p88
      %p91 = scmp.ne.s32.totalorder %s76, %s90
      %p92 = scmp.eq.s32.totalorder %s24, 0
      %p93 = por %p91, %p92
      %s95 = sadd.s32 %s94, 1
      %p98 = scmp.eq.s32.totalorder %s18, 1
      %p99 = scmp.ne.s32.totalorder %s94, %s96
      %p100 = scmp.eq.s32.totalorder %s18, 0
      %p101 = por %p99, %p100
      %p102 = scmp.ne.s32.totalorder %s94, %s96
      %p103 = scmp.eq.s32.totalorder %s23, 1
      %p104 = por %p102, %p103
      %p105 = scmp.ne.s32.totalorder %s96, %s97
      %p106 = scmp.eq.s32.totalorder %s23, 0
      %p107 = por %p105, %p106
      %p108 = scmp.ne.s32.totalorder %s96, %s97
      %p109 = scmp.eq.s32.totalorder %s24, 1
      %p110 = por %p108, %p109
      %p112 = scmp.ne.s32.totalorder %s97, %s111
      %p113 = scmp.eq.s32.totalorder %s24, 0
      %p114 = por %p112, %p113
      %s116 = sadd.s32 %s115, 1
      %p119 = scmp.eq.s32.totalorder %s18, 1
      %p120 = scmp.ne.s32.totalorder %s115, %s117
      %p121 = scmp.eq.s32.totalorder %s18, 0
      %p122 = por %p120, %p121
      %p123 = scmp.ne.s32.totalorder %s115, %s117
      %p124 = scmp.eq.s32.totalorder %s23, 1
      %p125 = por %p123, %p124
      %p126 = scmp.ne.s32.totalorder %s117, %s118
      %p127 = scmp.eq.s32.totalorder %s23, 0
      %p128 = por %p126, %p127
      %p129 = scmp.ne.s32.totalorder %s117, %s118
      %p130 = scmp.eq.s32.totalorder %s24, 1
      %p131 = por %p129, %p130
      %p133 = scmp.ne.s32.totalorder %s118, %s132
      %p134 = scmp.eq.s32.totalorder %s24, 0
      %p135 = por %p133, %p134
      %s137 = sadd.s32 %s136, 1
      %p140 = scmp.eq.s32.totalorder %s18, 1
      %p141 = scmp.ne.s32.totalorder %s136, %s138
      %p142 = scmp.eq.s32.totalorder %s18, 0
      %p143 = por %p141, %p142
      %p144 = scmp.ne.s32.totalorder %s136, %s138
      %p145 = scmp.eq.s32.totalorder %s23, 1
      %p146 = por %p144, %p145
      %p147 = scmp.ne.s32.totalorder %s138, %s139
      %p148 = scmp.eq.s32.totalorder %s23, 0
      %p149 = por %p147, %p148
      %p150 = scmp.ne.s32.totalorder %s138, %s139
      %p151 = scmp.eq.s32.totalorder %s24, 1
      %p152 = por %p150, %p151
      %p154 = scmp.ne.s32.totalorder %s139, %s153
      %p155 = scmp.eq.s32.totalorder %s24, 0
      %p156 = por %p154, %p155
      %s158 = sadd.s32 %s157, 1
      %p161 = scmp.eq.s32.totalorder %s18, 1
      %p162 = scmp.ne.s32.totalorder %s157, %s159
      %p163 = scmp.eq.s32.totalorder %s18, 0
      %p164 = por %p162, %p163
      %p165 = scmp.ne.s32.totalorder %s157, %s159
      %p166 = scmp.eq.s32.totalorder %s23, 1
      %p167 = por %p165, %p166
      %p168 = scmp.ne.s32.totalorder %s159, %s160
      %p169 = scmp.eq.s32.totalorder %s23, 0
      %p170 = por %p168, %p169
      %p171 = scmp.ne.s32.totalorder %s159, %s160
      %p172 = scmp.eq.s32.totalorder %s24, 1
      %p173 = por %p171, %p172
      %p175 = scmp.ne.s32.totalorder %s160, %s174
      %p176 = scmp.eq.s32.totalorder %s24, 0
      %p177 = por %p175, %p176
      %s178 = ssub.s32 %s18, %s25
      %p179 = scmp.eq.s32.totalorder %s178, 0
      %s181 = sadd.s32 %s180, 1
      %s182 = scalar_select %p179, %s180, %s181
      %p185 = pneg %p179
      %p186 = scmp.eq.s32.totalorder %s18, 1
      %p187 = por %p185, %p186
      %p188 = scmp.ne.s32.totalorder %s180, %s183
      %p189 = scmp.eq.s32.totalorder %s18, 0
      %p190 = por %p188, %p189
      %p191 = scmp.ne.s32.totalorder %s180, %s183
      %p192 = scmp.eq.s32.totalorder %s23, 1
      %p193 = por %p191, %p192
      %p194 = scmp.ne.s32.totalorder %s183, %s184
      %p195 = scmp.eq.s32.totalorder %s23, 0
      %p196 = por %p194, %p195
      %p197 = scmp.ne.s32.totalorder %s183, %s184
      %p198 = scmp.eq.s32.totalorder %s24, 1
      %p199 = por %p197, %p198
      %p201 = scmp.ne.s32.totalorder %s184, %s200
      %p202 = scmp.eq.s32.totalorder %s24, 0
      %p203 = por %p201, %p202
      %p204 = scmp.le.s32.totalorder 1, %s18
      %p205 = scmp.lt.s32.totalorder %s18, 3
      %p206 = pnand %p204, %p205
      %p207 = pneg %p206
      // Predicated region
      $region9: #{tpu_custom_call.1} parent=5 // pred_check
        _
      $region10: #{tpu_custom_call.1} parent=5 // pred_check_branch
        %209 = sbr.rel (%p206) target = $region12
      $region11: #{tpu_custom_call.1} parent=5 // pred_region
        %s210 = ssub.s32 %s18, 1
        // Predicated region
        $region13: #{tpu_custom_call.1} parent=11 // pred_check
          %p211 = pneg %p65
        $region14: #{tpu_custom_call.1} parent=11 // pred_check_branch
          %213 = sbr.rel (%p211) target = $region16
        $region15: #{tpu_custom_call.1} parent=11 // pred_region
          _
        $region16: #{tpu_custom_call.1} parent=11 // pred_fallthru
          _
        // Predicated region
        $region17: #{tpu_custom_call.1} parent=11 // pred_check
          %p214 = pneg %p86
        $region18: #{tpu_custom_call.1} parent=11 // pred_check_branch
          %216 = sbr.rel (%p214) target = $region20
        $region19: #{tpu_custom_call.1} parent=11 // pred_region
          _
        $region20: #{tpu_custom_call.1} parent=11 // pred_fallthru
          _
        // Predicated region
        $region21: #{tpu_custom_call.1} parent=11 // pred_check
          %p217 = pneg %p107
        $region22: #{tpu_custom_call.1} parent=11 // pred_check_branch
          %219 = sbr.rel (%p217) target = $region24
        $region23: #{tpu_custom_call.1} parent=11 // pred_region
          _
        $region24: #{tpu_custom_call.1} parent=11 // pred_fallthru
          _
        // Predicated region
        $region25: #{tpu_custom_call.1} parent=11 // pred_check
          %p220 = pneg %p128
        $region26: #{tpu_custom_call.1} parent=11 // pred_check_branch
          %222 = sbr.rel (%p220) target = $region28
        $region27: #{tpu_custom_call.1} parent=11 // pred_region
          _
        $region28: #{tpu_custom_call.1} parent=11 // pred_fallthru
          _
        // Predicated region
        $region29: #{tpu_custom_call.1} parent=11 // pred_check
          %p223 = pneg %p149
        $region30: #{tpu_custom_call.1} parent=11 // pred_check_branch
          %225 = sbr.rel (%p223) target = $region32
        $region31: #{tpu_custom_call.1} parent=11 // pred_region
          _
        $region32: #{tpu_custom_call.1} parent=11 // pred_fallthru
          _
        // Predicated region
        $region33: #{tpu_custom_call.1} parent=11 // pred_check
          %p226 = pneg %p170
        $region34: #{tpu_custom_call.1} parent=11 // pred_check_branch
          %228 = sbr.rel (%p226) target = $region36
        $region35: #{tpu_custom_call.1} parent=11 // pred_region
          _
        $region36: #{tpu_custom_call.1} parent=11 // pred_fallthru
          _
      $region12: #{tpu_custom_call.1} parent=5 // pred_fallthru
        _
      %p229 = scmp.lt.s32.totalorder %s18, 2
      // Predicated region
      $region37: #{tpu_custom_call.1} parent=5 // pred_check
        %p230 = pneg %p229
      $region38: #{tpu_custom_call.1} parent=5 // pred_check_branch
        %232 = sbr.rel (%p230) target = $region40
      $region39: #{tpu_custom_call.1} parent=5 // pred_region
        // Predicated region
        $region41: #{tpu_custom_call.1} parent=39 // pred_check
          %p233 = pneg %p38
        $region42: #{tpu_custom_call.1} parent=39 // pred_check_branch
          %235 = sbr.rel (%p233) target = $region44
        $region43: #{tpu_custom_call.1} parent=39 // pred_region
          %p236 = scmp.lt.s32.totalorder %s18, 1
          %s237 = scalar_select %p236, %s18, 1
          %s238 = scalar_lea.vmem %s0, %s237
        $region44: #{tpu_custom_call.1} parent=39 // pred_fallthru
          _
      $region40: #{tpu_custom_call.1} parent=5 // pred_fallthru
        _
      %p239 = scmp.le.s32.totalorder 1, %s18
      %p240 = scmp.lt.s32.totalorder %s18, 3
      %p241 = pnand %p239, %p240
      %p242 = pneg %p241
      // Predicated region
      $region45: #{tpu_custom_call.1} parent=5 // pred_check
        _
      $region46: #{tpu_custom_call.1} parent=5 // pred_check_branch
        %244 = sbr.rel (%p241) target = $region48
      $region47: #{tpu_custom_call.1} parent=5 // pred_region
        %s245 = ssub.s32 %s18, 1
        %p246 = scmp.lt.s32.totalorder %s23, 1
        %s247 = scalar_select %p246, %s23, 1
        %s248 = scalar_lea.vmem %s0, %s247
        %p249 = pneg %p44
        %p250 = pneg %p41
        %p251 = pneg %p65
        %p252 = pneg %p62
        %p253 = pneg %p86
        %p254 = pneg %p83
        %p255 = pneg %p107
        %p256 = pneg %p104
        %p257 = pneg %p128
        %p258 = pneg %p125
        %p259 = pneg %p149
        %p260 = pneg %p146
        %p261 = pneg %p170
        %p262 = pneg %p167
        %p263 = pneg %p196
        %p264 = pneg %p193
        %s265 = sand.u32 %s183, 1
        %s266 = scalar_lea.sflag [#allocation4], %s265
        %s267 = sand.u32 %s183, 1
        %s268 = scalar_lea.vmem [#allocation3], %s267
        %p269 = scmp.lt.s32.totalorder %s23, 1
        %s270 = scalar_select %p269, %s23, 1
        %s271 = scalar_lea.vmem %s0, %s270
        %v272 = vld [vmem:[%s271] sm:$0x1]
        %v273 = vld [vmem:[%s1] sm:$0xff]
        %v274 = vld [vmem:[%s1 + $0x8] sm:$0xff]
        %v275 = vld [vmem:[%s1 + $0x10] sm:$0xff]
        %v276 = vld [vmem:[%s1 + $0x18] sm:$0xff]
        %v277 = vld [vmem:[%s2] sm:$0xff]
        %v278 = vld [vmem:[%s2 + $0x8] sm:$0xff]
        %v279 = vld [vmem:[%s2 + $0x10] sm:$0xff]
        %v280 = vld [vmem:[%s2 + $0x18] sm:$0xff]
        %282 = vset.pattern.permute.xlu0 0
        %283 = vperm.xlu0 %282, %v273
        %v284 = vpop.permute.xlu0 %283
        %287 = vset.pattern.permute.xlu0 0
        %288 = vperm.xlu0 %287, %v274
        %v289 = vpop.permute.xlu0 %288
        %292 = vset.pattern.permute.xlu0 0
        %293 = vperm.xlu0 %292, %v275
        %v294 = vpop.permute.xlu0 %293
        %297 = vset.pattern.permute.xlu0 0
        %298 = vperm.xlu0 %297, %v276
        %v299 = vpop.permute.xlu0 %298
        %v302 = vperm.slane %v272, 0
        %v304 = vmul.f32 %v284, %v302
        %v305 = vmul.f32 %v289, %v302
        %v306 = vmul.f32 %v294, %v302
        %v307 = vmul.f32 %v299, %v302
        %309 = vset.pattern.permute.xlu0 0
        %310 = vperm.xlu0 %309, %v277
        %v311 = vpop.permute.xlu0 %310
        %314 = vset.pattern.permute.xlu0 0
        %315 = vperm.xlu0 %314, %v278
        %v316 = vpop.permute.xlu0 %315
        %319 = vset.pattern.permute.xlu0 0
        %320 = vperm.xlu0 %319, %v279
        %v321 = vpop.permute.xlu0 %320
        %324 = vset.pattern.permute.xlu0 0
        %325 = vperm.xlu0 %324, %v280
        %v326 = vpop.permute.xlu0 %325
        %v328 = vadd.f32 %v304, %v311
        %v329 = vadd.f32 %v305, %v316
        %v330 = vadd.f32 %v306, %v321
        %v331 = vadd.f32 %v307, %v326
        %v332 = vld [vmem:[%s3] sm:$0xff]
        %v333 = vld [vmem:[%s3 + $0x8] sm:$0xff]
        %v334 = vld [vmem:[%s3 + $0x10] sm:$0xff]
        %v335 = vld [vmem:[%s3 + $0x18] sm:$0xff]
        %v336 = vld [vmem:[%s4] sm:$0xff]
        %v337 = vld [vmem:[%s4 + $0x8] sm:$0xff]
        %v338 = vld [vmem:[%s4 + $0x10] sm:$0xff]
        %v339 = vld [vmem:[%s4 + $0x18] sm:$0xff]
        %v340 = vtanh.pop %v328
        %v341 = vtanh.pop %v329
        %v342 = vtanh.pop %v330
        %v343 = vtanh.pop %v331
        %345 = vset.pattern.permute.xlu0 0
        %346 = vperm.xlu0 %345, %v336
        %v347 = vpop.permute.xlu0 %346
        %350 = vset.pattern.permute.xlu0 0
        %351 = vperm.xlu0 %350, %v337
        %v352 = vpop.permute.xlu0 %351
        %355 = vset.pattern.permute.xlu0 0
        %356 = vperm.xlu0 %355, %v338
        %v357 = vpop.permute.xlu0 %356
        %360 = vset.pattern.permute.xlu0 0
        %361 = vperm.xlu0 %360, %v339
        %v362 = vpop.permute.xlu0 %361
        %vm364 = vcmask 261120
        %v366 = vsel %vm364, %v332, 0
        %v369 = vsel %vm364, %v333, 0
        %v372 = vsel %vm364, %v334, 0
        %v375 = vsel %vm364, %v335, 0
        %377 = vmatpush.msra.mxu0 0.0
        %378 = vmatpush.msra.mxu0 0.0
        %379 = vmatpush.msra.mxu0 0.0
        %380 = vmatpush.msra.mxu0 0.0
        %381 = vmatpush.msra.mxu0 0.0
        %382 = vmatpush.msra.mxu0 0.0
        %383 = vmatpush.msra.mxu0 0.0
        %384 = vmatpush.msra.mxu0 0.0
        %385 = vmatpush.msra.mxu0 0.0
        %386 = vmatpush.msra.mxu0 0.0
        %387 = vmatpush.msra.mxu0 0.0
        %388 = vmatpush.msra.mxu0 0.0
        %389 = vmatpush.msra.mxu0 %v343
        %390 = vmatpush.msra.mxu0 %v342
        %391 = vmatpush.msra.mxu0 %v341
        %392 = vmatpush.msra.mxu0 %v340
        %393 = vmatmul.f32.gmra.mxu0 %v366
        %v394 = vpop.f32.mrf.mxu0
        %v395 = vadd.f32 %v347, %v394
        %396 = vmatmul.f32.gmra.mxu0 %v369
        %v397 = vpop.f32.mrf.mxu0
        %v398 = vadd.f32 %v352, %v397
        %399 = vmatmul.f32.gmra.mxu0 %v372
        %v400 = vpop.f32.mrf.mxu0
        %v401 = vadd.f32 %v357, %v400
        %402 = vmatmul.f32.gmra.mxu0 %v375
        %v403 = vpop.f32.mrf.mxu0
        %v404 = vadd.f32 %v362, %v403
        %405 = vdwg.mxu0
        %v406 = vld [vmem:[%s5] sm:$0xff]
        %v407 = vld [vmem:[%s5 + $0x8] sm:$0xff]
        %v408 = vld [vmem:[%s5 + $0x10] sm:$0xff]
        %v409 = vld [vmem:[%s5 + $0x18] sm:$0xff]
        %v410 = vld [vmem:[#allocation2] sm:$0x1]
        %v411 = vtanh.pop %v395
        %v412 = vtanh.pop %v398
        %v413 = vtanh.pop %v401
        %v414 = vtanh.pop %v404
        %416 = vset.pattern.permute.xlu0 0
        %417 = vperm.xlu0 %416, %v406
        %v418 = vpop.permute.xlu0 %417
        %421 = vset.pattern.permute.xlu0 0
        %422 = vperm.xlu0 %421, %v407
        %v423 = vpop.permute.xlu0 %422
        %426 = vset.pattern.permute.xlu0 0
        %427 = vperm.xlu0 %426, %v408
        %v428 = vpop.permute.xlu0 %427
        %431 = vset.pattern.permute.xlu0 0
        %432 = vperm.xlu0 %431, %v409
        %v433 = vpop.permute.xlu0 %432
        %v435 = vmul.f32 %v418, %v411
        %v436 = vmul.f32 %v423, %v412
        %v437 = vmul.f32 %v428, %v413
        %v438 = vmul.f32 %v433, %v414
        %v439 = vadd.f32 %v435, %v436
        %v440 = vadd.f32 %v439, %v437
        %v441 = vadd.f32 %v440, %v438
        %v442 = vrot.slane %v441, 4
        %v443 = vadd.f32 %v441, %v442
        %v444 = vrot.slane %v443, 2
        %v445 = vadd.f32 %v443, %v444
        %v446 = vrot.slane %v445, 1
        %v447 = vadd.f32 %v445, %v446
        %449 = vset.pattern.permute.xlu0 0
        %450 = vperm.xlu0 %449, %v410
        %v451 = vpop.permute.xlu0 %450
        %v453 = vperm.slane %v451, 0
        %v454 = vadd.f32 %v447, %v453
        %455 = vst [vmem:[%s268] sm:$0x1] %v454
        %s456 = sand.u32 %s183, 1
        %s457 = scalar_lea.sflag [#allocation4], %s456
        %s458 = sand.u32 %s183, 1
        %s459 = scalar_lea.vmem [#allocation3], %s458
        // Predicated region
        $region49: #{tpu_custom_call.1} parent=47 // pred_check
          %p460 = pneg %p193
        $region50: #{tpu_custom_call.1} parent=47 // pred_check_branch
          %462 = sbr.rel (%p460) target = $region52
        $region51: #{tpu_custom_call.1} parent=47 // pred_region
          %464 = vsyncadd %s457, 0
          %s465 = scalar_lea.hbm %s7, %s23
          %s467 = sshll.u32 %s459, 4
          %s468 = int_to_ptr.vmem [resolvable:$true] %s467
          %s469 = sshll.u32 %s465, 4
          %s470 = int_to_ptr.hbm [resolvable:$true] %s469
          %472 = dma.vmem_to_hbm [thread:$0]  %s468, 16, %s470, %s457
        $region52: #{tpu_custom_call.1} parent=47 // pred_fallthru
          _
      $region48: #{tpu_custom_call.1} parent=5 // pred_fallthru
        _
      %p473 = scmp.le.s32.totalorder 2, %s18
      // Predicated region
      $region53: #{tpu_custom_call.1} parent=5 // pred_check
        %p474 = pneg %p473
      $region54: #{tpu_custom_call.1} parent=5 // pred_check_branch
        %476 = sbr.rel (%p474) target = $region56
      $region55: #{tpu_custom_call.1} parent=5 // pred_region
        %s477 = ssub.s32 %s18, 2
        // Predicated region
        $region57: #{tpu_custom_call.1} parent=55 // pred_check
          %p478 = pneg %p199
        $region58: #{tpu_custom_call.1} parent=55 // pred_check_branch
          %480 = sbr.rel (%p478) target = $region60
        $region59: #{tpu_custom_call.1} parent=55 // pred_region
          %s481 = sand.u32 %s184, 1
          %s482 = scalar_lea.sflag [#allocation4], %s481
          %s483 = sand.u32 %s184, 1
          %s484 = scalar_lea.vmem [#allocation3], %s483
          %486 = dma.done %s482, 16
        $region60: #{tpu_custom_call.1} parent=55 // pred_fallthru
          _
      $region56: #{tpu_custom_call.1} parent=5 // pred_fallthru
        _
    $region6: #{tpu_custom_call.1} parent=1 // loop_footer
      %s22 = sadd.s32 1, %s18
    $region7: #{tpu_custom_call.1} parent=1 // loop_footer_branch
      %17 = sbr.rel target = $region3
    $region8: #{tpu_custom_call.1} parent=1 // loop_exit
      _
    %487 = vsyncpa [#allocation4], 1
    %s488 = scalar_lea.sflag [#allocation4], 1
    %489 = vsyncpa %s488, 1

</llo_original>
